<compile_context>
chip_gen: v6e
topology: v6e:2x2x1
jax: 0.10.0
libtpu: 0.0.40
codegen_flags: <defaults>
</compile_context>

<pallas_src>
import jax
import jax.numpy as jnp
from jax import lax
from jax.experimental import pallas as pl
from jax.experimental.pallas import tpu as pltpu

EMB_DIM = 16                      # per-tower embedding dim (16 + 16 = 32)
HIDDEN = 32
NUM_USERS = 64
NUM_ITEMS = 64
VOCAB = NUM_USERS + NUM_ITEMS     # 128 — exactly one MXU-width of K

# MXU operand dtype.  float32 keeps parity with the PyTorch f32 reference at
# 1e-4 tolerance; on v6e/v7x this may be set to jnp.bfloat16 (the one-hot is
# exact in bf16, the fused table loses ~3 decimal digits -> loosen tolerance).
MXU_DTYPE = jnp.float32


def _round_up(x, m):
    return (x + m - 1) // m * m


def rank_kernel(uid_ref, iid_ref, w1t_ref, b1_ref, w2_ref, b2_ref, out_ref):
    """One batch tile, fully lane-major (batch lives on the lane axis).

    uid_ref, iid_ref : [1, TB]          int32 (item ids already offset by NUM_USERS)
    w1t_ref          : [HIDDEN, VOCAB]  = (blockdiag(userEmb, itemEmb) @ W1).T
    b1_ref, w2_ref   : [HIDDEN, 1]
    b2_ref           : [1, 1]
    out_ref          : [1, TB]
    """
    vocab = w1t_ref.shape[1]
    tb = uid_ref.shape[1]

    # Fused two-tower gather: one one-hot with TWO ones per column (user row +
    # offset item row), so a single [HIDDEN,VOCAB] @ [VOCAB,TB] matmul does
    # gather(user) + gather(item) + Linear(32,32) in one MXU pass.
    # NOTE: out-of-range ids silently yield a zero contribution (PyTorch's
    # nn.Embedding would raise); ids are assumed clean, as in the original.
    row = lax.broadcasted_iota(jnp.int32, (vocab, tb), 0)
    onehot = jnp.logical_or(row == uid_ref[...], row == iid_ref[...])
    onehot = onehot.astype(MXU_DTYPE)

    h = jnp.dot(w1t_ref[...].astype(MXU_DTYPE), onehot,
                preferred_element_type=jnp.float32)            # [HIDDEN, TB]
    h = jnp.maximum(h + b1_ref[...], 0.0)                      # bias + ReLU (VPU)

    # Final Linear(32, 1): VPU multiply + sublane reduce (no N=1 matmul).
    # Score lands on the lane axis -> unmasked, lane-dense store.
    out_ref[...] = (jnp.sum(h * w2_ref[...], axis=0, keepdims=True)
                    + b2_ref[...])                             # [1, TB]


def model_rank_forward(data_user, data_item, params, *, tile_b=1024):
    """Pallas implementation of cls_modelRank.forward -> logits [B, 1]."""
    B = data_user.shape[0]
    tile_b = min(tile_b, _round_up(max(B, 1), 128))
    tile_b = _round_up(tile_b, 128)
    b_pad = _round_up(B, tile_b)

    # Pad the batch with valid ids (0); padded columns are computed & dropped.
    uid = jnp.pad(data_user.astype(jnp.int32), (0, b_pad - B))[None, :]
    iid = jnp.pad(data_item.astype(jnp.int32) + NUM_USERS,
                  (0, b_pad - B))[None, :]

    # Fold both embedding tables and the first Linear into one table:
    #   fused = blockdiag(userEmb, itemEmb) @ W1   -> [VOCAB, HIDDEN]
    w1 = params["w1"]                                          # [2*EMB, HIDDEN]
    fused = jnp.concatenate(
        [params["user_emb"] @ w1[:EMB_DIM, :],
         params["item_emb"] @ w1[EMB_DIM:, :]], axis=0)        # [VOCAB, HIDDEN]
    w1t = fused.T                                              # [HIDDEN, VOCAB]
    b1 = params["b1"].reshape(HIDDEN, 1)
    w2 = params["w2"].reshape(HIDDEN, 1)
    b2 = params["b2"].reshape(1, 1)

    grid = (b_pad // tile_b,)
    flops = 2 * b_pad * VOCAB * HIDDEN + 4 * b_pad * HIDDEN
    bytes_accessed = (3 * b_pad + HIDDEN * VOCAB + 2 * HIDDEN + 1) * 4

    out = pl.pallas_call(
        rank_kernel,
        out_shape=jax.ShapeDtypeStruct((1, b_pad), jnp.float32),
        grid=grid,
        in_specs=[
            pl.BlockSpec((1, tile_b), lambda i: (0, i)),       # user ids
            pl.BlockSpec((1, tile_b), lambda i: (0, i)),       # item ids (+64)
            pl.BlockSpec((HIDDEN, VOCAB), lambda i: (0, 0)),   # fused W1^T
            pl.BlockSpec((HIDDEN, 1), lambda i: (0, 0)),       # b1
            pl.BlockSpec((HIDDEN, 1), lambda i: (0, 0)),       # w2
            pl.BlockSpec((1, 1), lambda i: (0, 0)),            # b2
        ],
        out_specs=pl.BlockSpec((1, tile_b), lambda i: (0, i)),
        compiler_params=pltpu.CompilerParams(
            dimension_semantics=("parallel",)),
        cost_estimate=pl.CostEstimate(flops=flops, transcendentals=0,
                                      bytes_accessed=bytes_accessed),
    )(uid, iid, w1t, b1, w2, b2)

    return out[0, :B].reshape(B, 1)


def init_params(key):
    ks = jax.random.split(key, 6)
    return {
        "user_emb": jax.random.normal(ks[0], (NUM_USERS, EMB_DIM), jnp.float32),
        "item_emb": jax.random.normal(ks[1], (NUM_ITEMS, EMB_DIM), jnp.float32),
        # Linear weights stored as [in, out] (PyTorch Linear weight is [out, in]).
        "w1": jax.random.normal(ks[2], (2 * EMB_DIM, HIDDEN), jnp.float32) * 0.1,
        "b1": jax.random.normal(ks[3], (1, HIDDEN), jnp.float32) * 0.1,
        "w2": jax.random.normal(ks[4], (HIDDEN, 1), jnp.float32) * 0.1,
        "b2": jax.random.normal(ks[5], (1, 1), jnp.float32) * 0.1,
    }


def reference_forward(data_user, data_item, params):
    embu = params["user_emb"][data_user.astype(jnp.int32)]
    embi = params["item_emb"][data_item.astype(jnp.int32)]
    x = jnp.concatenate([embu, embi], axis=1)
    h = jnp.maximum(x @ params["w1"] + params["b1"], 0.0)
    return h @ params["w2"] + params["b2"]


if __name__ == "__main__":
    kp, ku, ki = jax.random.split(jax.random.PRNGKey(0), 3)
    params = init_params(kp)

    # Small primary case (single tile).
    B = 8
    data_user = jax.random.randint(ku, (B,), 0, NUM_USERS, dtype=jnp.int32)
    data_item = jax.random.randint(ki, (B,), 0, NUM_ITEMS, dtype=jnp.int32)

    logits = model_rank_forward(data_user, data_item, params)
    jax.block_until_ready(logits)
    ref = reference_forward(data_user, data_item, params)
    assert logits.shape == (B, 1)
    assert jnp.allclose(logits, ref, atol=1e-4, rtol=1e-4)

    # Exercise the multi-tile grid path (parallel batch axis + tail padding).
    B2 = 300
    ku2, ki2 = jax.random.split(jax.random.PRNGKey(1))
    du2 = jax.random.randint(ku2, (B2,), 0, NUM_USERS, dtype=jnp.int32)
    di2 = jax.random.randint(ki2, (B2,), 0, NUM_ITEMS, dtype=jnp.int32)
    logits2 = model_rank_forward(du2, di2, params, tile_b=128)
    jax.block_until_ready(logits2)
    ref2 = reference_forward(du2, di2, params)
    assert logits2.shape == (B2, 1)
    assert jnp.allclose(logits2, ref2, atol=1e-4, rtol=1e-4)

    print("KERNEL_OK")
</pallas_src>

<mosaic_0001>
module attributes {stable_mosaic.version = 11 : i64} {
  func.func @rank_kernel(%arg0: i32, %arg1: memref<1x128xi32, #tpu.memory_space<vmem>>, %arg2: memref<1x128xi32, #tpu.memory_space<vmem>>, %arg3: memref<32x128xf32, #tpu.memory_space<vmem>>, %arg4: memref<32x1xf32, #tpu.memory_space<vmem>>, %arg5: memref<32x1xf32, #tpu.memory_space<vmem>>, %arg6: memref<1x1xf32, #tpu.memory_space<vmem>>, %arg7: memref<1x128xf32, #tpu.memory_space<vmem>>) attributes {dimension_semantics = [#tpu.dimension_semantics<parallel>], iteration_bounds = array<i64: 1>, scalar_prefetch = 0 : i64, scratch_operands = 0 : i64, tpu.core_type = #tpu.core_type<tc>, window_params = [{transform_indices = @transform_0, window_bounds = array<i64: 1, 128>}, {transform_indices = @transform_1, window_bounds = array<i64: 1, 128>}, {pipeline_mode = #tpu.pipeline_mode<synchronous>, transform_indices = @transform_2, window_bounds = array<i64: 32, 128>}, {pipeline_mode = #tpu.pipeline_mode<synchronous>, transform_indices = @transform_3, window_bounds = array<i64: 32, 1>}, {pipeline_mode = #tpu.pipeline_mode<synchronous>, transform_indices = @transform_4, window_bounds = array<i64: 32, 1>}, {pipeline_mode = #tpu.pipeline_mode<synchronous>, transform_indices = @transform_5, window_bounds = array<i64: 1, 1>}, {transform_indices = @transform_6, window_bounds = array<i64: 1, 128>}]} {
    %0 = tpu.iota {dimensions = array<i32: 0>} : vector<128x128xi32>
    %c0 = arith.constant 0 : index
    %c0_0 = arith.constant 0 : index
    %1 = vector.load %arg1[%c0, %c0_0] : memref<1x128xi32, #tpu.memory_space<vmem>>, vector<1x128xi32>
    %2 = vector.broadcast %1 : vector<1x128xi32> to vector<128x128xi32>
    %3 = arith.cmpi eq, %0, %2 : vector<128x128xi32>
    %c0_1 = arith.constant 0 : index
    %c0_2 = arith.constant 0 : index
    %4 = vector.load %arg2[%c0_1, %c0_2] : memref<1x128xi32, #tpu.memory_space<vmem>>, vector<1x128xi32>
    %5 = vector.broadcast %4 : vector<1x128xi32> to vector<128x128xi32>
    %6 = arith.cmpi eq, %0, %5 : vector<128x128xi32>
    %7 = arith.ori %3, %6 : vector<128x128xi1>
    %8 = arith.extui %7 : vector<128x128xi1> to vector<128x128xi32>
    %9 = arith.sitofp %8 : vector<128x128xi32> to vector<128x128xf32>
    %c0_3 = arith.constant 0 : index
    %c0_4 = arith.constant 0 : index
    %10 = vector.load %arg3[%c0_3, %c0_4] : memref<32x128xf32, #tpu.memory_space<vmem>>, vector<32x128xf32>
    %cst = arith.constant dense<0.000000e+00> : vector<32x128xf32>
    %11 = tpu.matmul %10, %9, %cst {dimension_numbers = #tpu.dot_dimension_numbers<[1], [0], [0], [1], [0, 0, 1, 1], [], []>} : vector<32x128xf32>, vector<128x128xf32>, vector<32x128xf32> -> vector<32x128xf32>
    %c0_5 = arith.constant 0 : index
    %c0_6 = arith.constant 0 : index
    %12 = vector.load %arg4[%c0_5, %c0_6] : memref<32x1xf32, #tpu.memory_space<vmem>>, vector<32x1xf32>
    %13 = vector.broadcast %12 : vector<32x1xf32> to vector<32x128xf32>
    %14 = arith.addf %11, %13 : vector<32x128xf32>
    %cst_7 = arith.constant 0.000000e+00 : f32
    %15 = vector.broadcast %cst_7 : f32 to vector<32x128xf32>
    %16 = arith.maximumf %14, %15 : vector<32x128xf32>
    %c0_8 = arith.constant 0 : index
    %c0_9 = arith.constant 0 : index
    %17 = vector.load %arg5[%c0_8, %c0_9] : memref<32x1xf32, #tpu.memory_space<vmem>>, vector<32x1xf32>
    %18 = vector.broadcast %17 : vector<32x1xf32> to vector<32x128xf32>
    %19 = arith.mulf %16, %18 : vector<32x128xf32>
    %cst_10 = arith.constant dense<0.000000e+00> : vector<128xf32>
    %20 = vector.multi_reduction <add>, %19, %cst_10 [0] : vector<32x128xf32> to vector<128xf32>
    %21 = vector.shape_cast %20 : vector<128xf32> to vector<1x128xf32>
    %c0_11 = arith.constant 0 : index
    %c0_12 = arith.constant 0 : index
    %22 = vector.load %arg6[%c0_11, %c0_12] : memref<1x1xf32, #tpu.memory_space<vmem>>, vector<1x1xf32>
    %23 = vector.broadcast %22 : vector<1x1xf32> to vector<1x128xf32>
    %24 = arith.addf %21, %23 : vector<1x128xf32>
    %c0_13 = arith.constant 0 : index
    %c0_14 = arith.constant 0 : index
    %25 = vector.load %arg7[%c0_13, %c0_14] : memref<1x128xf32, #tpu.memory_space<vmem>>, vector<1x128xf32>
    tpu.vector_store %arg7[%c0_13, %c0_14], %24 {strides = array<i32>} : memref<1x128xf32, #tpu.memory_space<vmem>>, vector<1x128xf32>,
    return
  }
  func.func @transform_0(%arg0: i32) -> (i32, i32) {
    %c0_i32 = arith.constant 0 : i32
    %c0_i32_0 = arith.constant 0 : i32
    return %c0_i32, %arg0 : i32, i32
  }
  func.func @transform_1(%arg0: i32) -> (i32, i32) {
    %c0_i32 = arith.constant 0 : i32
    %c0_i32_0 = arith.constant 0 : i32
    return %c0_i32, %arg0 : i32, i32
  }
  func.func @transform_2(%arg0: i32) -> (i32, i32) {
    %c0_i32 = arith.constant 0 : i32
    %c0_i32_0 = arith.constant 0 : i32
    %c0_i32_1 = arith.constant 0 : i32
    return %c0_i32, %c0_i32_0 : i32, i32
  }
  func.func @transform_3(%arg0: i32) -> (i32, i32) {
    %c0_i32 = arith.constant 0 : i32
    %c0_i32_0 = arith.constant 0 : i32
    %c0_i32_1 = arith.constant 0 : i32
    return %c0_i32, %c0_i32_0 : i32, i32
  }
  func.func @transform_4(%arg0: i32) -> (i32, i32) {
    %c0_i32 = arith.constant 0 : i32
    %c0_i32_0 = arith.constant 0 : i32
    %c0_i32_1 = arith.constant 0 : i32
    return %c0_i32, %c0_i32_0 : i32, i32
  }
  func.func @transform_5(%arg0: i32) -> (i32, i32) {
    %c0_i32 = arith.constant 0 : i32
    %c0_i32_0 = arith.constant 0 : i32
    %c0_i32_1 = arith.constant 0 : i32
    return %c0_i32, %c0_i32_0 : i32, i32
  }
  func.func @transform_6(%arg0: i32) -> (i32, i32) {
    %c0_i32 = arith.constant 0 : i32
    %c0_i32_0 = arith.constant 0 : i32
    return %c0_i32, %arg0 : i32, i32
  }
}

</mosaic_0001>

<llo_original>
// kernel: tpu_custom_call.1
$region0: #{tpu_custom_call.1}
  #allocation0 [shape = 'u32[]', space=smem, size = 0x4, offset = 0x4, fixed_abs, tag = 'smem constant byte address 0x4 - core index']
  #allocation1 [shape = 'u32[144,128]{1,0:T(1,128)}', space=vmem, size = 0x12000, scoped, tag = 'internal scratch']
  #allocation2 [shape = 'f32[1,1]{1,0:T(1,128)S(1)}', space=vmem, size = 0x200, scoped, tag = 'scoped memory for tpu_custom_call.1']
  %s0 = inlined_call_operand.vmem [shape: s32[1,128], index: 0, kind: input, shape index: {}]
  %s1 = inlined_call_operand.vmem [shape: s32[1,128], index: 1, kind: input, shape index: {}]
  %s2 = inlined_call_operand.vmem [shape: f32[32,128], index: 2, kind: input, shape index: {}]
  %s3 = inlined_call_operand.vmem [shape: f32[32,1], index: 3, kind: input, shape index: {}]
  %s4 = inlined_call_operand.vmem [shape: f32[32,1], index: 4, kind: input, shape index: {}]
  %s5 = inlined_call_operand.<no memory space> [shape: f32[1,1], index: 5, kind: input, shape index: {}]
  %s6 = inlined_call_operand.hbm [shape: f32[1,128], index: 6, kind: output, shape index: {}]
  %s7 = sld [smem:[#allocation0]]
  $region34: #{tpu_custom_call.1} parent=0
    _
  %s9 = ssub.s32 1, %s7
  %s10 = scalar_select 0, %s9, %s7
  %v11 = vstv %s5
  %12 = vst [vmem:[#allocation2] sm:$0x1] %v11
  $region1: #{tpu_custom_call.1} parent=0
    #allocation3 [shape = 'u8[512]{0}', space=vmem, size = 0x400, scoped, tag = 'output window, operand 0, single buffered']
    #allocation4 [shape = 's32[1]{0}', space=sflag, size = 0x4, scoped, tag = 'scoped memory for tpu_custom_call.1']
    %13 = vsyncpa [#allocation4], 0
    // Predicated region
    $region2: #{tpu_custom_call.1} parent=1 // pred_check
      _
    $region3: #{tpu_custom_call.1} parent=1 // pred_check_branch
      %15 = sbr.rel (0) target = $region5
    $region4: #{tpu_custom_call.1} parent=1 // pred_region
      _
    $region5: #{tpu_custom_call.1} parent=1 // pred_fallthru
      _
    // Predicated region
    $region6: #{tpu_custom_call.1} parent=1 // pred_check
      _
    $region7: #{tpu_custom_call.1} parent=1 // pred_check_branch
      %17 = sbr.rel (0) target = $region9
    $region8: #{tpu_custom_call.1} parent=1 // pred_region
      _
    $region9: #{tpu_custom_call.1} parent=1 // pred_fallthru
      _
    // Predicated region
    $region10: #{tpu_custom_call.1} parent=1 // pred_check
      _
    $region11: #{tpu_custom_call.1} parent=1 // pred_check_branch
      %19 = sbr.rel (0) target = $region13
    $region12: #{tpu_custom_call.1} parent=1 // pred_region
      _
    $region13: #{tpu_custom_call.1} parent=1 // pred_fallthru
      _
    // Predicated region
    $region14: #{tpu_custom_call.1} parent=1 // pred_check
      _
    $region15: #{tpu_custom_call.1} parent=1 // pred_check_branch
      %21 = sbr.rel (0) target = $region17
    $region16: #{tpu_custom_call.1} parent=1 // pred_region
      _
    $region17: #{tpu_custom_call.1} parent=1 // pred_fallthru
      _
    // Predicated region
    $region18: #{tpu_custom_call.1} parent=1 // pred_check
      _
    $region19: #{tpu_custom_call.1} parent=1 // pred_check_branch
      %23 = sbr.rel (0) target = $region21
    $region20: #{tpu_custom_call.1} parent=1 // pred_region
      _
    $region21: #{tpu_custom_call.1} parent=1 // pred_fallthru
      _
    // Predicated region
    $region22: #{tpu_custom_call.1} parent=1 // pred_check
      _
    $region23: #{tpu_custom_call.1} parent=1 // pred_check_branch
      %25 = sbr.rel (0) target = $region25
    $region24: #{tpu_custom_call.1} parent=1 // pred_region
      _
    $region25: #{tpu_custom_call.1} parent=1 // pred_fallthru
      _
    %v26 = vlaneseq
    %v27 = vshrl.u32 %v26, 7
    %v28 = vadd.s32 %v27, 8
    %v29 = vadd.s32 %v27, 16
    %v30 = vadd.s32 %v27, 24
    %v31 = vadd.s32 %v27, 32
    %v32 = vadd.s32 %v27, 40
    %v33 = vadd.s32 %v27, 48
    %v34 = vadd.s32 %v27, 56
    %v35 = vadd.s32 %v27, 64
    %v36 = vadd.s32 %v27, 72
    %v37 = vadd.s32 %v27, 80
    %v38 = vadd.s32 %v27, 88
    %v39 = vadd.s32 %v27, 96
    %v40 = vadd.s32 %v27, 104
    %v41 = vadd.s32 %v27, 112
    %v42 = vadd.s32 %v27, 120
    %v43 = vld [vmem:[%s0] sm:$0x1]
    %v44 = vlaneseq
    %v45 = vshrl.u32 %v44, 7
    %v46 = vsub.s32 0, %v45
    %v47 = vrot.slane %v43, %v46
    %vm48 = vcmp.eq.s32.totalorder %v27, %v47
    %vm49 = vcmp.eq.s32.totalorder %v28, %v47
    %vm50 = vcmp.eq.s32.totalorder %v29, %v47
    %vm51 = vcmp.eq.s32.totalorder %v30, %v47
    %vm52 = vcmp.eq.s32.totalorder %v31, %v47
    %vm53 = vcmp.eq.s32.totalorder %v32, %v47
    %vm54 = vcmp.eq.s32.totalorder %v33, %v47
    %vm55 = vcmp.eq.s32.totalorder %v34, %v47
    %vm56 = vcmp.eq.s32.totalorder %v35, %v47
    %vm57 = vcmp.eq.s32.totalorder %v36, %v47
    %vm58 = vcmp.eq.s32.totalorder %v37, %v47
    %vm59 = vcmp.eq.s32.totalorder %v38, %v47
    %vm60 = vcmp.eq.s32.totalorder %v39, %v47
    %vm61 = vcmp.eq.s32.totalorder %v40, %v47
    %vm62 = vcmp.eq.s32.totalorder %v41, %v47
    %vm63 = vcmp.eq.s32.totalorder %v42, %v47
    %v64 = vld [vmem:[%s1] sm:$0x1]
    %v65 = vlaneseq
    %v66 = vshrl.u32 %v65, 7
    %v67 = vsub.s32 0, %v66
    %v68 = vrot.slane %v64, %v67
    %vm69 = vcmp.eq.s32.totalorder %v27, %v68
    %vm70 = vcmp.eq.s32.totalorder %v28, %v68
    %vm71 = vcmp.eq.s32.totalorder %v29, %v68
    %vm72 = vcmp.eq.s32.totalorder %v30, %v68
    %vm73 = vcmp.eq.s32.totalorder %v31, %v68
    %vm74 = vcmp.eq.s32.totalorder %v32, %v68
    %vm75 = vcmp.eq.s32.totalorder %v33, %v68
    %vm76 = vcmp.eq.s32.totalorder %v34, %v68
    %vm77 = vcmp.eq.s32.totalorder %v35, %v68
    %vm78 = vcmp.eq.s32.totalorder %v36, %v68
    %vm79 = vcmp.eq.s32.totalorder %v37, %v68
    %vm80 = vcmp.eq.s32.totalorder %v38, %v68
    %vm81 = vcmp.eq.s32.totalorder %v39, %v68
    %vm82 = vcmp.eq.s32.totalorder %v40, %v68
    %vm83 = vcmp.eq.s32.totalorder %v41, %v68
    %vm84 = vcmp.eq.s32.totalorder %v42, %v68
    %vm85 = vmor %vm48, %vm69
    %vm86 = vmor %vm49, %vm70
    %vm87 = vmor %vm50, %vm71
    %vm88 = vmor %vm51, %vm72
    %vm89 = vmor %vm52, %vm73
    %vm90 = vmor %vm53, %vm74
    %vm91 = vmor %vm54, %vm75
    %vm92 = vmor %vm55, %vm76
    %vm93 = vmor %vm56, %vm77
    %vm94 = vmor %vm57, %vm78
    %vm95 = vmor %vm58, %vm79
    %vm96 = vmor %vm59, %vm80
    %vm97 = vmor %vm60, %vm81
    %vm98 = vmor %vm61, %vm82
    %vm99 = vmor %vm62, %vm83
    %vm100 = vmor %vm63, %vm84
    %v101 = vsel %vm85, 1, 0
    %v102 = vsel %vm86, 1, 0
    %v103 = vsel %vm87, 1, 0
    %v104 = vsel %vm88, 1, 0
    %v105 = vsel %vm89, 1, 0
    %v106 = vsel %vm90, 1, 0
    %v107 = vsel %vm91, 1, 0
    %v108 = vsel %vm92, 1, 0
    %v109 = vsel %vm93, 1, 0
    %v110 = vsel %vm94, 1, 0
    %v111 = vsel %vm95, 1, 0
    %v112 = vsel %vm96, 1, 0
    %v113 = vsel %vm97, 1, 0
    %v114 = vsel %vm98, 1, 0
    %v115 = vsel %vm99, 1, 0
    %v116 = vsel %vm100, 1, 0
    %v117 = vcvt.s32.f32 %v101
    %v118 = vcvt.s32.f32 %v102
    %v119 = vcvt.s32.f32 %v103
    %v120 = vcvt.s32.f32 %v104
    %v121 = vcvt.s32.f32 %v105
    %v122 = vcvt.s32.f32 %v106
    %v123 = vcvt.s32.f32 %v107
    %v124 = vcvt.s32.f32 %v108
    %v125 = vcvt.s32.f32 %v109
    %v126 = vcvt.s32.f32 %v110
    %v127 = vcvt.s32.f32 %v111
    %v128 = vcvt.s32.f32 %v112
    %v129 = vcvt.s32.f32 %v113
    %v130 = vcvt.s32.f32 %v114
    %v131 = vcvt.s32.f32 %v115
    %v132 = vcvt.s32.f32 %v116
    %v133 = vld [vmem:[%s2] sm:$0xff]
    %v134 = vld [vmem:[%s2 + $0x8] sm:$0xff]
    %v135 = vld [vmem:[%s2 + $0x10] sm:$0xff]
    %v136 = vld [vmem:[%s2 + $0x18] sm:$0xff]
    %v137 = vld [vmem:[%s3] sm:$0xff]
    %v138 = vld [vmem:[%s3 + $0x8] sm:$0xff]
    %v139 = vld [vmem:[%s3 + $0x10] sm:$0xff]
    %v140 = vld [vmem:[%s3 + $0x18] sm:$0xff]
    %142 = vset.pattern.permute.xlu0 0
    %143 = vperm.xlu0 %142, %v137
    %v144 = vpop.permute.xlu0 %143
    %147 = vset.pattern.permute.xlu0 0
    %148 = vperm.xlu0 %147, %v138
    %v149 = vpop.permute.xlu0 %148
    %152 = vset.pattern.permute.xlu0 0
    %153 = vperm.xlu0 %152, %v139
    %v154 = vpop.permute.xlu0 %153
    %157 = vset.pattern.permute.xlu0 0
    %158 = vperm.xlu0 %157, %v140
    %v159 = vpop.permute.xlu0 %158
    %161 = vmatprep.subr.mxu0 0.0
    %162 = vmatpush1.msra.mxu0 %v132
    %163 = vmatprep.subr.mxu0 0.0
    %164 = vmatpush1.msra.mxu0 %v131
    %165 = vmatprep.subr.mxu0 0.0
    %166 = vmatpush1.msra.mxu0 %v130
    %167 = vmatprep.subr.mxu0 0.0
    %168 = vmatpush1.msra.mxu0 %v129
    %169 = vmatprep.subr.mxu0 0.0
    %170 = vmatpush1.msra.mxu0 %v128
    %171 = vmatprep.subr.mxu0 0.0
    %172 = vmatpush1.msra.mxu0 %v127
    %173 = vmatprep.subr.mxu0 0.0
    %174 = vmatpush1.msra.mxu0 %v126
    %175 = vmatprep.subr.mxu0 0.0
    %176 = vmatpush1.msra.mxu0 %v125
    %177 = vmatprep.subr.mxu0 0.0
    %178 = vmatpush1.msra.mxu0 %v124
    %179 = vmatprep.subr.mxu0 0.0
    %180 = vmatpush1.msra.mxu0 %v123
    %181 = vmatprep.subr.mxu0 0.0
    %182 = vmatpush1.msra.mxu0 %v122
    %183 = vmatprep.subr.mxu0 0.0
    %184 = vmatpush1.msra.mxu0 %v121
    %185 = vmatprep.subr.mxu0 0.0
    %186 = vmatpush1.msra.mxu0 %v120
    %187 = vmatprep.subr.mxu0 0.0
    %188 = vmatpush1.msra.mxu0 %v119
    %189 = vmatprep.subr.mxu0 0.0
    %190 = vmatpush1.msra.mxu0 %v118
    %191 = vmatprep.subr.mxu0 0.0
    %192 = vmatpush1.msra.mxu0 %v117
    %193 = vmatprep.subr.mxu0 0.0
    %194 = vmatpush2.msra.mxu0 0.0
    %195 = vmatprep.subr.mxu0 0.0
    %196 = vmatpush2.msra.mxu0 0.0
    %197 = vmatprep.subr.mxu0 0.0
    %198 = vmatpush2.msra.mxu0 0.0
    %199 = vmatprep.subr.mxu0 0.0
    %200 = vmatpush2.msra.mxu0 0.0
    %201 = vmatprep.subr.mxu0 0.0
    %202 = vmatpush2.msra.mxu0 0.0
    %203 = vmatprep.subr.mxu0 0.0
    %204 = vmatpush2.msra.mxu0 0.0
    %205 = vmatprep.subr.mxu0 0.0
    %206 = vmatpush2.msra.mxu0 0.0
    %207 = vmatprep.subr.mxu0 0.0
    %208 = vmatpush2.msra.mxu0 0.0
    %209 = vmatprep.subr.mxu0 0.0
    %210 = vmatpush2.msra.mxu0 0.0
    %211 = vmatprep.subr.mxu0 0.0
    %212 = vmatpush2.msra.mxu0 0.0
    %213 = vmatprep.subr.mxu0 0.0
    %214 = vmatpush2.msra.mxu0 0.0
    %215 = vmatprep.subr.mxu0 0.0
    %216 = vmatpush2.msra.mxu0 0.0
    %217 = vmatprep.subr.mxu0 0.0
    %218 = vmatpush2.msra.mxu0 0.0
    %219 = vmatprep.subr.mxu0 0.0
    %220 = vmatpush2.msra.mxu0 0.0
    %221 = vmatprep.subr.mxu0 0.0
    %222 = vmatpush2.msra.mxu0 0.0
    %223 = vmatprep.subr.mxu0 0.0
    %224 = vmatpush2.msra.mxu0 0.0
    %225 = vmatprep.mubr.f32.mxu0 0.0
    %226 = vmatmul.mubr.f32.gmra.mxu0 %v133
    %v227 = vpop.f32.mrf.mxu0
    %v228 = vadd.f32 %v144, %v227
    %v229 = vpop.f32.mrf.mxu0
    %230 = vmatprep.mubr.f32.mxu0 0.0
    %231 = vmatmul.mubr.f32.gmra.mxu0 %v134
    %v232 = vpop.f32.mrf.mxu0
    %v233 = vadd.f32 %v149, %v232
    %v234 = vpop.f32.mrf.mxu0
    %235 = vmatprep.mubr.f32.mxu0 0.0
    %236 = vmatmul.mubr.f32.gmra.mxu0 %v135
    %v237 = vpop.f32.mrf.mxu0
    %v238 = vadd.f32 %v154, %v237
    %v239 = vpop.f32.mrf.mxu0
    %240 = vmatprep.mubr.f32.mxu0 0.0
    %241 = vmatmul.mubr.f32.gmra.mxu0 %v136
    %v242 = vpop.f32.mrf.mxu0
    %v243 = vadd.f32 %v159, %v242
    %v244 = vpop.f32.mrf.mxu0
    %245 = vdwg.mxu0
    %v246 = vmax.f32 %v228, 0.0
    %v247 = vmax.f32 %v233, 0.0
    %v248 = vmax.f32 %v238, 0.0
    %v249 = vmax.f32 %v243, 0.0
    %v250 = vld [vmem:[%s4] sm:$0xff]
    %v251 = vld [vmem:[%s4 + $0x8] sm:$0xff]
    %v252 = vld [vmem:[%s4 + $0x10] sm:$0xff]
    %v253 = vld [vmem:[%s4 + $0x18] sm:$0xff]
    %255 = vset.pattern.permute.xlu0 0
    %256 = vperm.xlu0 %255, %v250
    %v257 = vpop.permute.xlu0 %256
    %260 = vset.pattern.permute.xlu0 0
    %261 = vperm.xlu0 %260, %v251
    %v262 = vpop.permute.xlu0 %261
    %265 = vset.pattern.permute.xlu0 0
    %266 = vperm.xlu0 %265, %v252
    %v267 = vpop.permute.xlu0 %266
    %270 = vset.pattern.permute.xlu0 0
    %271 = vperm.xlu0 %270, %v253
    %v272 = vpop.permute.xlu0 %271
    %v274 = vmul.f32 %v246, %v257
    %v275 = vmul.f32 %v247, %v262
    %v276 = vmul.f32 %v248, %v267
    %v277 = vmul.f32 %v249, %v272
    %v278 = vadd.f32 %v274, %v275
    %v279 = vadd.f32 %v278, %v276
    %v280 = vadd.f32 %v279, %v277
    %v281 = vrot.slane %v280, 4
    %v282 = vadd.f32 %v280, %v281
    %v283 = vrot.slane %v282, 2
    %v284 = vadd.f32 %v282, %v283
    %v285 = vrot.slane %v284, 1
    %v286 = vadd.f32 %v284, %v285
    %v287 = vld [vmem:[#allocation2] sm:$0x1]
    %289 = vset.pattern.permute.xlu0 0
    %290 = vperm.xlu0 %289, %v287
    %v291 = vpop.permute.xlu0 %290
    %v293 = vlaneseq
    %v294 = vshrl.u32 %v293, 7
    %v295 = vsub.s32 0, %v294
    %v296 = vrot.slane %v291, %v295
    %v297 = vadd.f32 %v286, %v296
    %298 = vst [vmem:[#allocation3] sm:$0x1] %v297
    // Predicated region
    $region26: #{tpu_custom_call.1} parent=1 // pred_check
      _
    $region27: #{tpu_custom_call.1} parent=1 // pred_check_branch
      %300 = sbr.rel (0) target = $region29
    $region28: #{tpu_custom_call.1} parent=1 // pred_region
      %s302 = ssub.s32 16, 16
      %303 = vsyncadd [#allocation4], %s302
      %s305 = sshll.u32 [#allocation3], 4
      %s306 = int_to_ptr.vmem [resolvable:$true] %s305
      %308 = dma.vmem_to_hbm [thread:$0]  %s306, 16, %s6, [#allocation4]
    $region29: #{tpu_custom_call.1} parent=1 // pred_fallthru
      _
    // Predicated region
    $region30: #{tpu_custom_call.1} parent=1 // pred_check
      _
    $region31: #{tpu_custom_call.1} parent=1 // pred_check_branch
      %310 = sbr.rel (0) target = $region33
    $region32: #{tpu_custom_call.1} parent=1 // pred_region
      %311 = dma.done [#allocation4], 16
    $region33: #{tpu_custom_call.1} parent=1 // pred_fallthru
      _
    %312 = vsyncpa [#allocation4], 1

</llo_original>
